<compile_context>
chip_gen: v7x
topology: tpu7x:2x2x1
jax: 0.10.0
libtpu: 0.0.40
codegen_flags: <defaults>
</compile_context>

<pallas_src>
import jax
import jax.numpy as jnp
from jax.experimental import pallas as pl
from jax.experimental.pallas import tpu as pltpu

NUM_CLASSES = 352

# Collapse to a single block only for very small N; above this we always emit
# >= 2 grid steps so v7x's two TensorCores both get work (v5e/v6e: harmless).
_SINGLE_BLOCK_MAX = 512
# Don't let a requested tile push the double-buffered working set near v7x's
# 64 MiB physical VMEM.
_MAX_TILE_N = 3072


def _uturn_kernel(c_ref, h_ref, lab_ref, tan_ref, o_ref):
    # c_ref:   (1,)      f32 in SMEM (fp16 module constant upcast to f32)
    # h_ref:   (TN, C)   f32
    # lab_ref: (TN, 1)   i32
    # tan_ref: (TN, C)   f32
    # o_ref:   (TN, C)   f32
    h = h_ref[...]

    # Numerically-stable softmax along the class (lane) axis.
    m = jnp.max(h, axis=1, keepdims=True)
    e = jnp.exp(h - m)
    # approx=False keeps the 1e-5 tolerance; the kernel is HBM-bound so the
    # exact reciprocal costs nothing measurable.
    sm = e * pl.reciprocal(jnp.sum(e, axis=1, keepdims=True), approx=False)

    lab = lab_ref[...]          # (TN, 1) i32
    valid = lab != -1           # (TN, 1) bool

    # Fold the trailing (* -1.0) and the validity mask into the per-row scalar
    # and the one-hot term:
    #   -((sm*c + one_hot) * mask) * tan == (sm * c_row + neg_one_hot) * tan
    c_row = jnp.where(valid, -c_ref[0], 0.0)                        # (TN, 1)
    classes = jax.lax.broadcasted_iota(jnp.int32, h.shape, 1)       # (TN, C)
    # classes == -1 is never true, so rows with label == -1 already get 0 here.
    neg_one_hot = jnp.where(classes == lab, -1.0, 0.0)              # (TN, C)

    o_ref[...] = (sm * c_row + neg_one_hot) * tan_ref[...]


def gcn_uturn_loss(h, labels, tangents, const_fp16, *, tile_n=1024):
    """Pallas implementation of GCNUturnLossCP.forward (fp32 in/out)."""
    N, C = h.shape
    labels2d = labels.astype(jnp.int32).reshape(N, 1)
    # torch fp32 * fp16 promotes to fp32; upcast the constant exactly.
    const32 = const_fp16.astype(jnp.float32).reshape(1)

    # Clamp requested tile and keep it a sublane multiple.
    tile_n = max(8, (min(int(tile_n), _MAX_TILE_N) // 8) * 8)

    if N <= _SINGLE_BLOCK_MAX:
        # One full-array block: no per-step overhead, and a full-extent block
        # sidesteps the (8,128) divisibility requirement.
        tn = N
    else:
        # At least 2 grid steps (v7x megacore), never bigger than tile_n.
        half = -(-N // 2)            # cdiv(N, 2)
        half = -(-half // 8) * 8     # round up to sublane multiple
        tn = min(tile_n, half)
    grid = (pl.cdiv(N, tn),)

    # Double-buffered per-step VMEM estimate: full-row tiles for h/tangents/out
    # plus the lane-padded (tn, 128) labels buffers.
    vmem_est = 2 * (3 * tn * C * 4 + tn * 128 * 4)
    compiler_kwargs = dict(dimension_semantics=("parallel",))
    if vmem_est > 14 * 1024 * 1024:
        # Above v5e's 16 MiB scoped default (physical VMEM is fine everywhere);
        # raise the limit with headroom, staying well under v7x's 64 MiB.
        compiler_kwargs["vmem_limit_bytes"] = min(
            (vmem_est * 3) // 2, 48 * 1024 * 1024)

    cost = pl.CostEstimate(
        flops=6 * N * C,
        transcendentals=N * C,
        bytes_accessed=3 * N * C * 4 + N * 4 + 4,
    )

    return pl.pallas_call(
        _uturn_kernel,
        out_shape=jax.ShapeDtypeStruct((N, C), jnp.float32),
        grid=grid,
        in_specs=[
            pl.BlockSpec(memory_space=pltpu.MemorySpace.SMEM),  # const scalar
            pl.BlockSpec((tn, C), lambda i: (i, 0)),            # h
            pl.BlockSpec((tn, 1), lambda i: (i, 0)),            # labels (N,1)
            pl.BlockSpec((tn, C), lambda i: (i, 0)),            # tangents
        ],
        out_specs=pl.BlockSpec((tn, C), lambda i: (i, 0)),
        compiler_params=pltpu.CompilerParams(**compiler_kwargs),
        cost_estimate=cost,
    )(const32, h, labels2d, tangents)


def _reference(h, labels, tangents, const_fp16):
    sm = jax.nn.softmax(h.astype(jnp.float32), axis=1)
    mul2 = sm * const_fp16.astype(jnp.float32)
    oh = jax.nn.one_hot(labels, NUM_CLASSES, dtype=jnp.float32)
    add = mul2 + oh
    mask = (labels != -1)[:, None].astype(jnp.float32)
    return -(add * mask) * tangents


def _run_case(key, n):
    k_h, k_lab, k_tan, k_const = jax.random.split(key, 4)
    h = jax.random.normal(k_h, (n, NUM_CLASSES), dtype=jnp.float32)
    labels = jax.random.randint(k_lab, (n,), 0, NUM_CLASSES, dtype=jnp.int32)
    labels = labels.at[n // 3].set(-1)  # exercise the (labels != -1) mask
    tangents = jax.random.normal(k_tan, (n, NUM_CLASSES), dtype=jnp.float32)
    const_fp16 = jax.random.normal(k_const, (1, 1), dtype=jnp.float32).astype(jnp.float16)

    out = jax.block_until_ready(gcn_uturn_loss(h, labels, tangents, const_fp16))
    ref = _reference(h, labels, tangents, const_fp16)
    assert out.shape == (n, NUM_CLASSES) and out.dtype == jnp.float32
    assert jnp.allclose(out, ref, atol=1e-5, rtol=1e-5)


if __name__ == "__main__":
    key = jax.random.PRNGKey(0)
    k_small, k_mid, k_tail = jax.random.split(key, 3)

    # Small shape consistent with the module's single-block fast path.
    _run_case(k_small, 16)
    # Mid-size N: forces >= 2 grid steps (v7x dual-core path) + masked tail.
    _run_case(k_mid, 600)
    # Full 1024-row tiles with a 1-row tail block (tiny-remainder safety case).
    _run_case(k_tail, 2049)

    print("KERNEL_OK")
</pallas_src>

<mosaic_0001>
module attributes {stable_mosaic.version = 11 : i64} {
  func.func @_uturn_kernel(%arg0: i32, %arg1: memref<1xf32, #tpu.memory_space<smem>>, %arg2: memref<16x352xf32, #tpu.memory_space<vmem>>, %arg3: memref<16x1xi32, #tpu.memory_space<vmem>>, %arg4: memref<16x352xf32, #tpu.memory_space<vmem>>, %arg5: memref<16x352xf32, #tpu.memory_space<vmem>>) attributes {dimension_semantics = [#tpu.dimension_semantics<parallel>], iteration_bounds = array<i64: 1>, scalar_prefetch = 0 : i64, scratch_operands = 0 : i64, tpu.core_type = #tpu.core_type<tc>, window_params = [{transform_indices = @transform_0, window_bounds = array<i64: 1>}, {transform_indices = @transform_1, window_bounds = array<i64: 16, 352>}, {transform_indices = @transform_2, window_bounds = array<i64: 16, 1>}, {transform_indices = @transform_3, window_bounds = array<i64: 16, 352>}, {transform_indices = @transform_4, window_bounds = array<i64: 16, 352>}]} {
    %c0 = arith.constant 0 : index
    %c0_0 = arith.constant 0 : index
    %0 = vector.load %arg2[%c0, %c0_0] : memref<16x352xf32, #tpu.memory_space<vmem>>, vector<16x352xf32>
    %cst = arith.constant dense<0xFF800000> : vector<16xf32>
    %1 = vector.multi_reduction <maximumf>, %0, %cst [1] : vector<16x352xf32> to vector<16xf32>
    %2 = vector.shape_cast %1 : vector<16xf32> to vector<16x1xf32>
    %3 = vector.broadcast %2 : vector<16x1xf32> to vector<16x352xf32>
    %4 = arith.subf %0, %3 : vector<16x352xf32>
    %5 = math.exp %4 : vector<16x352xf32>
    %cst_1 = arith.constant dense<0.000000e+00> : vector<16xf32>
    %6 = vector.multi_reduction <add>, %5, %cst_1 [1] : vector<16x352xf32> to vector<16xf32>
    %7 = vector.shape_cast %6 : vector<16xf32> to vector<16x1xf32>
    %8 = tpu.reciprocal %7 : vector<16x1xf32> -> vector<16x1xf32>
    %9 = vector.broadcast %8 : vector<16x1xf32> to vector<16x352xf32>
    %10 = arith.mulf %5, %9 : vector<16x352xf32>
    %c0_2 = arith.constant 0 : index
    %c0_3 = arith.constant 0 : index
    %11 = vector.load %arg3[%c0_2, %c0_3] : memref<16x1xi32, #tpu.memory_space<vmem>>, vector<16x1xi32>
    %c-1_i32 = arith.constant -1 : i32
    %12 = vector.broadcast %c-1_i32 : i32 to vector<16x1xi32>
    %13 = arith.cmpi ne, %11, %12 : vector<16x1xi32>
    %c0_4 = arith.constant 0 : index
    %14 = memref.load %arg1[%c0_4] : memref<1xf32, #tpu.memory_space<smem>>
    %cst_5 = arith.constant 0.000000e+00 : f32
    %15 = arith.subf %cst_5, %14 : f32
    %cst_6 = arith.constant 0.000000e+00 : f32
    %16 = vector.broadcast %15 : f32 to vector<16x1xf32>
    %17 = vector.broadcast %cst_6 : f32 to vector<16x1xf32>
    %18 = arith.select %13, %16, %17 : vector<16x1xi1>, vector<16x1xf32>
    %19 = tpu.iota {dimensions = array<i32: 1>} : vector<16x352xi32>
    %20 = vector.broadcast %11 : vector<16x1xi32> to vector<16x352xi32>
    %21 = arith.cmpi eq, %19, %20 : vector<16x352xi32>
    %cst_7 = arith.constant -1.000000e+00 : f32
    %cst_8 = arith.constant 0.000000e+00 : f32
    %22 = vector.broadcast %cst_7 : f32 to vector<16x352xf32>
    %23 = vector.broadcast %cst_8 : f32 to vector<16x352xf32>
    %24 = arith.select %21, %22, %23 : vector<16x352xi1>, vector<16x352xf32>
    %25 = vector.broadcast %18 : vector<16x1xf32> to vector<16x352xf32>
    %26 = arith.mulf %10, %25 : vector<16x352xf32>
    %27 = arith.addf %26, %24 : vector<16x352xf32>
    %c0_9 = arith.constant 0 : index
    %c0_10 = arith.constant 0 : index
    %28 = vector.load %arg4[%c0_9, %c0_10] : memref<16x352xf32, #tpu.memory_space<vmem>>, vector<16x352xf32>
    %29 = arith.mulf %27, %28 : vector<16x352xf32>
    %c0_11 = arith.constant 0 : index
    %c0_12 = arith.constant 0 : index
    %30 = vector.load %arg5[%c0_11, %c0_12] : memref<16x352xf32, #tpu.memory_space<vmem>>, vector<16x352xf32>
    tpu.vector_store %arg5[%c0_11, %c0_12], %29 {strides = array<i32>} : memref<16x352xf32, #tpu.memory_space<vmem>>, vector<16x352xf32>,
    return
  }
  func.func @transform_0(%arg0: i32) -> i32 {
    %c0_i32 = arith.constant 0 : i32
    %c0_i32_0 = arith.constant 0 : i32
    return %c0_i32 : i32
  }
  func.func @transform_1(%arg0: i32) -> (i32, i32) {
    %c0_i32 = arith.constant 0 : i32
    %c0_i32_0 = arith.constant 0 : i32
    return %arg0, %c0_i32 : i32, i32
  }
  func.func @transform_2(%arg0: i32) -> (i32, i32) {
    %c0_i32 = arith.constant 0 : i32
    %c0_i32_0 = arith.constant 0 : i32
    return %arg0, %c0_i32 : i32, i32
  }
  func.func @transform_3(%arg0: i32) -> (i32, i32) {
    %c0_i32 = arith.constant 0 : i32
    %c0_i32_0 = arith.constant 0 : i32
    return %arg0, %c0_i32 : i32, i32
  }
  func.func @transform_4(%arg0: i32) -> (i32, i32) {
    %c0_i32 = arith.constant 0 : i32
    %c0_i32_0 = arith.constant 0 : i32
    return %arg0, %c0_i32 : i32, i32
  }
}

</mosaic_0001>

<llo_original>
// kernel: tpu_custom_call.1
$region0: #{tpu_custom_call.1}
  #allocation0 [shape = 'u32[]', space=smem, size = 0x4, offset = 0x4, fixed_abs, tag = 'smem constant byte address 0x4 - core index']
  #allocation1 [shape = 'u32[144,128]{1,0:T(1,128)}', space=vmem, size = 0x12000, scoped, tag = 'internal scratch']
  #allocation2 [shape = 'f32[1]{0:T(128)S(6)}', space=smem, size = 0x200, scoped, tag = 'scoped memory for tpu_custom_call.1']
  %s0 = inlined_call_operand.<no memory space> [shape: f32[1], index: 0, kind: input, shape index: {}]
  %s1 = inlined_call_operand.hbm [shape: f32[16,352], index: 1, kind: input, shape index: {}]
  %s2 = inlined_call_operand.vmem [shape: s32[16,1], index: 2, kind: input, shape index: {}]
  %s3 = inlined_call_operand.hbm [shape: f32[16,352], index: 3, kind: input, shape index: {}]
  %s4 = inlined_call_operand.hbm [shape: f32[16,352], index: 4, kind: output, shape index: {}]
  %s5 = sld [smem:[#allocation0]]
  $region34: #{tpu_custom_call.1} parent=0
    _
  %s7 = ssub.s32 1, %s5
  %s8 = scalar_select 0, %s7, %s5
  %9 = sst [smem:[#allocation2]] %s0
  $region1: #{tpu_custom_call.1} parent=0
    #allocation3 [shape = 'u8[24576]{0}', space=vmem, size = 0x6000, scoped, tag = 'input window, operand 1, single buffered']
    #allocation4 [shape = 's32[1]{0}', space=sflag, size = 0x4, scoped, tag = 'scoped memory for tpu_custom_call.1']
    #allocation5 [shape = 's32[1]{0}', space=sflag, size = 0x4, scoped, tag = 'scoped memory for tpu_custom_call.1']
    #allocation6 [shape = 'u8[24576]{0}', space=vmem, size = 0x6000, scoped, tag = 'input window, operand 3, single buffered']
    #allocation7 [shape = 's32[1]{0}', space=sflag, size = 0x4, scoped, tag = 'scoped memory for tpu_custom_call.1']
    #allocation8 [shape = 'u8[24576]{0}', space=vmem, size = 0x6000, scoped, tag = 'output window, operand 0, single buffered']
    %10 = vsyncpa [#allocation4], 0
    %11 = vsyncpa [#allocation7], 0
    %12 = vsyncpa [#allocation5], 0
    // Predicated region
    $region2: #{tpu_custom_call.1} parent=1 // pred_check
      _
    $region3: #{tpu_custom_call.1} parent=1 // pred_check_branch
      %14 = sbr.rel (0) target = $region5
    $region4: #{tpu_custom_call.1} parent=1 // pred_region
      _
    $region5: #{tpu_custom_call.1} parent=1 // pred_fallthru
      _
    // Predicated region
    $region6: #{tpu_custom_call.1} parent=1 // pred_check
      _
    $region7: #{tpu_custom_call.1} parent=1 // pred_check_branch
      %16 = sbr.rel (0) target = $region9
    $region8: #{tpu_custom_call.1} parent=1 // pred_region
      %s18 = ssub.s32 768, 768
      %19 = vsyncadd [#allocation4], %s18
      %s20 = sshll.u32 [#allocation3], 4
      %s21 = int_to_ptr.vmem [resolvable:$true] %s20
      %26 = dma.hbm_to_vmem [thread:$0]  %s1, 768, %s21, [#allocation4], 384, 384, 24
    $region9: #{tpu_custom_call.1} parent=1 // pred_fallthru
      _
    // Predicated region
    $region10: #{tpu_custom_call.1} parent=1 // pred_check
      _
    $region11: #{tpu_custom_call.1} parent=1 // pred_check_branch
      %28 = sbr.rel (0) target = $region13
    $region12: #{tpu_custom_call.1} parent=1 // pred_region
      _
    $region13: #{tpu_custom_call.1} parent=1 // pred_fallthru
      _
    // Predicated region
    $region14: #{tpu_custom_call.1} parent=1 // pred_check
      _
    $region15: #{tpu_custom_call.1} parent=1 // pred_check_branch
      %30 = sbr.rel (0) target = $region17
    $region16: #{tpu_custom_call.1} parent=1 // pred_region
      %s32 = ssub.s32 768, 768
      %33 = vsyncadd [#allocation7], %s32
      %s34 = sshll.u32 [#allocation6], 4
      %s35 = int_to_ptr.vmem [resolvable:$true] %s34
      %40 = dma.hbm_to_vmem [thread:$0]  %s3, 768, %s35, [#allocation7], 384, 384, 24
    $region17: #{tpu_custom_call.1} parent=1 // pred_fallthru
      _
    // Predicated region
    $region18: #{tpu_custom_call.1} parent=1 // pred_check
      _
    $region19: #{tpu_custom_call.1} parent=1 // pred_check_branch
      %42 = sbr.rel (0) target = $region21
    $region20: #{tpu_custom_call.1} parent=1 // pred_region
      %43 = dma.done [#allocation4], 768
    $region21: #{tpu_custom_call.1} parent=1 // pred_fallthru
      _
    // Predicated region
    $region22: #{tpu_custom_call.1} parent=1 // pred_check
      _
    $region23: #{tpu_custom_call.1} parent=1 // pred_check_branch
      %45 = sbr.rel (0) target = $region25
    $region24: #{tpu_custom_call.1} parent=1 // pred_region
      %46 = dma.done [#allocation7], 768
    $region25: #{tpu_custom_call.1} parent=1 // pred_fallthru
      _
    %v47 = vld [vmem:[#allocation3] sm:$0xff]
    %v48 = vld [vmem:[#allocation3 + $0x8] sm:$0xff]
    %v49 = vld [vmem:[#allocation3 + $0x10] sm:$0xff]
    %v50 = vld [vmem:[#allocation3 + $0x18] sm:$0xff]
    %v51 = vld [vmem:[#allocation3 + $0x20] sm:$0xff]
    %v52 = vld [vmem:[#allocation3 + $0x28] sm:$0xff]
    %vm53 = vcmask 785408
    %v54 = vsel %vm53, %v49, -inf
    %v55 = vmax.f32 %v47, %v54
    %v56 = vmax.f32 %v55, %v48
    %57 = vmax.xlane.f32.xlu0 %v56
    %v58 = vpop.xlane.xlu0 %57
    %v59 = vsel %vm53, %v52, -inf
    %v60 = vmax.f32 %v50, %v59
    %v61 = vmax.f32 %v60, %v51
    %62 = vmax.xlane.f32.xlu0 %v61
    %v63 = vpop.xlane.xlu0 %62
    %v64 = vsub.f32 %v47, %v58
    %v65 = vsub.f32 %v48, %v58
    %v66 = vsub.f32 %v49, %v58
    %v67 = vsub.f32 %v50, %v63
    %v68 = vsub.f32 %v51, %v63
    %v69 = vsub.f32 %v52, %v63
    %v70 = vmul.f32 %v64, 1.442695
    %v71 = vpow.pop %v70
    %v72 = vmul.f32 %v65, 1.442695
    %v73 = vpow.pop %v72
    %v74 = vmul.f32 %v66, 1.442695
    %v75 = vpow.pop %v74
    %v76 = vmul.f32 %v67, 1.442695
    %v77 = vpow.pop %v76
    %v78 = vmul.f32 %v68, 1.442695
    %v79 = vpow.pop %v78
    %v80 = vmul.f32 %v69, 1.442695
    %v81 = vpow.pop %v80
    %v82 = vadd.f32 %v71, %v73
    %v83 = vsel %vm53, %v75, 0.0
    %v84 = vadd.f32 %v82, %v83
    %85 = vadd.xlane.f32.xlu0 %v84
    %v86 = vpop.xlane.xlu0 %85
    %v87 = vadd.f32 %v77, %v79
    %v88 = vsel %vm53, %v81, 0.0
    %v89 = vadd.f32 %v87, %v88
    %90 = vadd.xlane.f32.xlu0 %v89
    %v91 = vpop.xlane.xlu0 %90
    %v92 = vrcp.pop %v86
    %v93 = vrcp.pop %v91
    %v94 = vmul.f32 %v71, %v92
    %v95 = vmul.f32 %v73, %v92
    %v96 = vmul.f32 %v75, %v92
    %v97 = vmul.f32 %v77, %v93
    %v98 = vmul.f32 %v79, %v93
    %v99 = vmul.f32 %v81, %v93
    %v100 = vld [vmem:[%s2] sm:$0xff]
    %v101 = vld [vmem:[%s2 + $0x8] sm:$0xff]
    %vm102 = vcmp.ne.s32.totalorder %v100, 4294967295
    %vm103 = vcmp.ne.s32.totalorder %v101, 4294967295
    %s104 = sld [smem:[#allocation2]]
    %s105 = ssub.f32 0.0, %s104
    %v106 = vstv %s105
    %v107 = vsel %vm102, %v106, 0.0
    %v108 = vsel %vm103, %v106, 0.0
    %v109 = vlaneseq
    %v110 = vand.u32 %v109, 127
    %v111 = vadd.s32 %v110, 128
    %v112 = vadd.s32 %v110, 256
    %113 = vset.pattern.permute.xlu0 0
    %114 = vperm.xlu0 %113, %v100
    %v115 = vpop.permute.xlu0 %114
    %116 = vset.pattern.permute.xlu0 0
    %117 = vperm.xlu0 %116, %v101
    %v118 = vpop.permute.xlu0 %117
    %vm119 = vcmp.eq.s32.totalorder %v110, %v115
    %vm120 = vcmp.eq.s32.totalorder %v111, %v115
    %vm121 = vcmp.eq.s32.totalorder %v112, %v115
    %vm122 = vcmp.eq.s32.totalorder %v110, %v118
    %vm123 = vcmp.eq.s32.totalorder %v111, %v118
    %vm124 = vcmp.eq.s32.totalorder %v112, %v118
    %v125 = vsel %vm119, -1.0, 0.0
    %v126 = vsel %vm120, -1.0, 0.0
    %v127 = vsel %vm121, -1.0, 0.0
    %v128 = vsel %vm122, -1.0, 0.0
    %v129 = vsel %vm123, -1.0, 0.0
    %v130 = vsel %vm124, -1.0, 0.0
    %132 = vset.pattern.permute.xlu0 0
    %133 = vperm.xlu0 %132, %v107
    %v134 = vpop.permute.xlu0 %133
    %137 = vset.pattern.permute.xlu0 0
    %138 = vperm.xlu0 %137, %v108
    %v139 = vpop.permute.xlu0 %138
    %v141 = vmul.f32 %v94, %v134
    %v142 = vmul.f32 %v95, %v134
    %v143 = vmul.f32 %v96, %v134
    %v144 = vmul.f32 %v97, %v139
    %v145 = vmul.f32 %v98, %v139
    %v146 = vmul.f32 %v99, %v139
    %v147 = vadd.f32 %v141, %v125
    %v148 = vadd.f32 %v142, %v126
    %v149 = vadd.f32 %v143, %v127
    %v150 = vadd.f32 %v144, %v128
    %v151 = vadd.f32 %v145, %v129
    %v152 = vadd.f32 %v146, %v130
    %v153 = vld [vmem:[#allocation6] sm:$0xff]
    %v154 = vld [vmem:[#allocation6 + $0x8] sm:$0xff]
    %v155 = vld [vmem:[#allocation6 + $0x10] sm:$0xff]
    %v156 = vld [vmem:[#allocation6 + $0x18] sm:$0xff]
    %v157 = vld [vmem:[#allocation6 + $0x20] sm:$0xff]
    %v158 = vld [vmem:[#allocation6 + $0x28] sm:$0xff]
    %v159 = vmul.f32 %v147, %v153
    %v160 = vmul.f32 %v148, %v154
    %v161 = vmul.f32 %v149, %v155
    %v162 = vmul.f32 %v150, %v156
    %v163 = vmul.f32 %v151, %v157
    %v164 = vmul.f32 %v152, %v158
    %165 = vst [vmem:[#allocation8] sm:$0xff] %v159
    %166 = vst [vmem:[#allocation8 + $0x8] sm:$0xff] %v160
    %167 = vst.msk [vmem:[#allocation8 + $0x10] sm:$0xff] %vm53, %v161
    %168 = vst [vmem:[#allocation8 + $0x18] sm:$0xff] %v162
    %169 = vst [vmem:[#allocation8 + $0x20] sm:$0xff] %v163
    %170 = vst.msk [vmem:[#allocation8 + $0x28] sm:$0xff] %vm53, %v164
    // Predicated region
    $region26: #{tpu_custom_call.1} parent=1 // pred_check
      _
    $region27: #{tpu_custom_call.1} parent=1 // pred_check_branch
      %172 = sbr.rel (0) target = $region29
    $region28: #{tpu_custom_call.1} parent=1 // pred_region
      %s174 = ssub.s32 768, 768
      %175 = vsyncadd [#allocation5], %s174
      %s176 = sshll.u32 [#allocation8], 4
      %s177 = int_to_ptr.vmem [resolvable:$true] %s176
      %182 = dma.vmem_to_hbm [thread:$0]  %s177, 768, %s4, [#allocation5], 384, 384, 24
    $region29: #{tpu_custom_call.1} parent=1 // pred_fallthru
      _
    // Predicated region
    $region30: #{tpu_custom_call.1} parent=1 // pred_check
      _
    $region31: #{tpu_custom_call.1} parent=1 // pred_check_branch
      %184 = sbr.rel (0) target = $region33
    $region32: #{tpu_custom_call.1} parent=1 // pred_region
      %185 = dma.done [#allocation5], 768
    $region33: #{tpu_custom_call.1} parent=1 // pred_fallthru
      _
    %186 = vsyncpa [#allocation4], 1
    %187 = vsyncpa [#allocation7], 1
    %188 = vsyncpa [#allocation5], 1

</llo_original>
